<compile_context>
chip_gen: v7x
topology: tpu7x:2x2x1
jax: 0.10.0
libtpu: 0.0.40
codegen_flags: <defaults>
</compile_context>

<pallas_src>
import functools

import jax
import jax.numpy as jnp
import numpy as np
from jax.experimental import pallas as pl
from jax.experimental.pallas import tpu as pltpu

EPS = 1e-5


def _mixconv_kernel(x_ref, wf_ref, w2_ref, mask_ref, o_ref, *, H, W, Wp):
    Sq = H * Wp                                  # working spatial frame length

    # In-kernel im2col: on the row-major flattened zero-padded image, the 3x3
    # tap (dy, dx) needed by output position q is the input at q + dy*Wp + dx,
    # i.e. a contiguous lane window.  Stack the 9 taps on the sublane
    # (channel) axis -> (9C, Sq).
    cols = [x_ref[0, :, pl.ds(dy * Wp + dx, Sq)]
            for dy in range(3) for dx in range(3)]
    xcol = jnp.concatenate(cols, axis=0).astype(jnp.float32)

    mask = mask_ref[...].astype(jnp.float32)     # (1, Sq): 1 on real pixels
    inv_n = 1.0 / float(H * W)

    def inorm(t):
        # InstanceNorm2d (affine=False): per-channel stats over the valid
        # spatial positions only.  Single-pass E[x^2] - E[x]^2 + rsqrt (EUP).
        tm = t * mask
        mu = jnp.sum(tm, axis=1, keepdims=True) * inv_n
        ms = jnp.sum(tm * t, axis=1, keepdims=True) * inv_n
        var = ms - mu * mu
        return (t - mu) * jax.lax.rsqrt(var + EPS)

    # grouped 3x3 conv: all 4 groups x 9 taps fused into one MXU push.
    # (conv bias b1 is absorbed by the following InstanceNorm -> skipped)
    h = jnp.dot(wf_ref[...], xcol, preferred_element_type=jnp.float32)
    h = jnp.maximum(inorm(h), 0.0)               # InstanceNorm -> ReLU

    # pointwise (1x1) conv (bias b2 likewise absorbed by the next InstanceNorm)
    h = jnp.dot(w2_ref[...], h, preferred_element_type=jnp.float32)
    h = jnp.maximum(inorm(h), 0.0)               # InstanceNorm -> ReLU

    o_ref[0] = h.astype(o_ref.dtype)


def mixconv_pallas(x, wconv, bconv, w2, b2):
    """x: (B, C, H, W); wconv: (C//4, C//4, 3, 3); bconv: (C//4,);
       w2: (C, C); b2: (C,).  Returns (B, C, H, W).

    bconv / b2 are accepted for API parity but are mathematically no-ops in
    this forward (each bias add is immediately followed by an InstanceNorm,
    which removes any per-channel constant), so they are not sent to the
    kernel."""
    del bconv, b2
    B, C, H, W = x.shape
    Wp = W + 2
    Sq = H * Wp                      # working frame: 2 junk columns per row

    # Single zero-pad: 1 top / 2 bottom rows, 1 left / 1 right cols, then a
    # row-major flatten (no transpose).  The extra bottom row provides the
    # slack so the furthest tap window (start 2*Wp + 2, length Sq) stays in
    # bounds: (H+3)*Wp >= (H+2)*Wp + 2.
    Spp = (H + 3) * Wp
    xf = jnp.pad(x, ((0, 0), (0, 0), (1, 2), (1, 1))).reshape(B, C, Spp)

    # Fused conv weight (C, 9C): per tap a block-diagonal over the 4 groups
    # (all groups share dwconv1's weight), taps concatenated along K.
    eye_g = jnp.eye(4, dtype=wconv.dtype)
    wfull = jnp.concatenate(
        [jnp.kron(eye_g, wconv[:, :, dy, dx])
         for dy in range(3) for dx in range(3)], axis=1)
    w2m = w2.reshape(C, C)

    # Validity mask over the H*Wp working frame (1 on real pixels, 0 on the
    # 2 pad columns of each row).
    mask = jnp.asarray((np.arange(Sq) % Wp < W).astype(np.float32)).reshape(1, Sq)

    params = [wfull, w2m, mask]

    def full_spec(a):
        nd = a.ndim
        return pl.BlockSpec(a.shape, lambda b, _nd=nd: (0,) * _nd)

    kernel = functools.partial(_mixconv_kernel, H=H, W=W, Wp=Wp)

    out = pl.pallas_call(
        kernel,
        out_shape=jax.ShapeDtypeStruct((B, C, Sq), x.dtype),
        grid_spec=pltpu.PrefetchScalarGridSpec(
            num_scalar_prefetch=0,
            grid=(B,),
            in_specs=[pl.BlockSpec((1, C, Spp), lambda b: (b, 0, 0))]
                     + [full_spec(a) for a in params],
            out_specs=pl.BlockSpec((1, C, Sq), lambda b: (b, 0, 0)),
        ),
        compiler_params=pltpu.CompilerParams(
            dimension_semantics=("parallel",)),
    )(xf, *params)

    # (B, C, H*Wp) -> (B, C, H, W): drop the 2 junk columns of each row
    # (lane-dense kernel stores; cheap layout-only slice in the wrapper).
    return out.reshape(B, C, H, Wp)[:, :, :, :W]


def mixconv_reference(x, wconv, bconv, w2, b2):
    """Pure-JAX reference mirroring the PyTorch forward (biases included)."""
    B, C, H, W = x.shape
    Cg = C // 4

    def conv3(t):
        y = jax.lax.conv_general_dilated(
            t, wconv, window_strides=(1, 1), padding=((1, 1), (1, 1)),
            dimension_numbers=("NCHW", "OIHW", "NCHW"),
            precision=jax.lax.Precision.HIGHEST)
        return y + bconv[None, :, None, None]

    parts = [conv3(x[:, g * Cg:(g + 1) * Cg]) for g in range(4)]
    out = jnp.concatenate(parts, axis=1)

    def inorm(t):
        mu = t.mean(axis=(2, 3), keepdims=True)
        var = ((t - mu) ** 2).mean(axis=(2, 3), keepdims=True)
        return (t - mu) / jnp.sqrt(var + EPS)

    out = jnp.maximum(inorm(out), 0.0)
    out = jnp.einsum("oi,bihw->bohw", w2, out,
                     precision=jax.lax.Precision.HIGHEST)
    out = out + b2[None, :, None, None]
    out = jnp.maximum(inorm(out), 0.0)
    return out


if __name__ == "__main__":
    B, C, H, W = 2, 16, 16, 16            # inp = oup = 16 -> 4 groups of 4 ch
    Cg = C // 4
    key = jax.random.PRNGKey(0)
    kx, kw1, kb1, kw2, kb2 = jax.random.split(key, 5)

    x = jax.random.normal(kx, (B, C, H, W), dtype=jnp.float32)
    wconv = 0.3 * jax.random.normal(kw1, (Cg, Cg, 3, 3), dtype=jnp.float32)
    bconv = 0.1 * jax.random.normal(kb1, (Cg,), dtype=jnp.float32)
    w2 = 0.3 * jax.random.normal(kw2, (C, C), dtype=jnp.float32)
    b2 = 0.1 * jax.random.normal(kb2, (C,), dtype=jnp.float32)

    out = jax.jit(mixconv_pallas)(x, wconv, bconv, w2, b2)
    out = jax.block_until_ready(out)

    ref = mixconv_reference(x, wconv, bconv, w2, b2)
    assert out.shape == (B, C, H, W)
    np.testing.assert_allclose(np.asarray(out), np.asarray(ref),
                               rtol=1e-4, atol=1e-4)
    print("KERNEL_OK")
</pallas_src>

<mosaic_0001>
module attributes {stable_mosaic.version = 11 : i64} {
  func.func @_mixconv_kernel(%arg0: i32, %arg1: memref<1x16x342xf32, #tpu.memory_space<vmem>>, %arg2: memref<16x144xf32, #tpu.memory_space<vmem>>, %arg3: memref<16x16xf32, #tpu.memory_space<vmem>>, %arg4: memref<1x288xf32, #tpu.memory_space<vmem>>, %arg5: memref<1x16x288xf32, #tpu.memory_space<vmem>>) attributes {dimension_semantics = [#tpu.dimension_semantics<parallel>], iteration_bounds = array<i64: 2>, scalar_prefetch = 0 : i64, scratch_operands = 0 : i64, tpu.core_type = #tpu.core_type<tc>, window_params = [{transform_indices = @transform_0, window_bounds = array<i64: 1, 16, 342>}, {pipeline_mode = #tpu.pipeline_mode<synchronous>, transform_indices = @transform_1, window_bounds = array<i64: 16, 144>}, {pipeline_mode = #tpu.pipeline_mode<synchronous>, transform_indices = @transform_2, window_bounds = array<i64: 16, 16>}, {pipeline_mode = #tpu.pipeline_mode<synchronous>, transform_indices = @transform_3, window_bounds = array<i64: 1, 288>}, {transform_indices = @transform_4, window_bounds = array<i64: 1, 16, 288>}]} {
    %c0 = arith.constant 0 : index
    %c0_0 = arith.constant 0 : index
    %c0_1 = arith.constant 0 : index
    %0 = vector.load %arg1[%c0, %c0_0, %c0_1] : memref<1x16x342xf32, #tpu.memory_space<vmem>>, vector<1x16x288xf32>
    %1 = vector.shape_cast %0 : vector<1x16x288xf32> to vector<16x288xf32>
    %c0_2 = arith.constant 0 : index
    %c0_3 = arith.constant 0 : index
    %c1 = arith.constant 1 : index
    %2 = vector.load %arg1[%c0_2, %c0_3, %c1] : memref<1x16x342xf32, #tpu.memory_space<vmem>>, vector<1x16x288xf32>
    %3 = vector.shape_cast %2 : vector<1x16x288xf32> to vector<16x288xf32>
    %c0_4 = arith.constant 0 : index
    %c0_5 = arith.constant 0 : index
    %c2 = arith.constant 2 : index
    %4 = vector.load %arg1[%c0_4, %c0_5, %c2] : memref<1x16x342xf32, #tpu.memory_space<vmem>>, vector<1x16x288xf32>
    %5 = vector.shape_cast %4 : vector<1x16x288xf32> to vector<16x288xf32>
    %c0_6 = arith.constant 0 : index
    %c0_7 = arith.constant 0 : index
    %c18 = arith.constant 18 : index
    %6 = vector.load %arg1[%c0_6, %c0_7, %c18] : memref<1x16x342xf32, #tpu.memory_space<vmem>>, vector<1x16x288xf32>
    %7 = vector.shape_cast %6 : vector<1x16x288xf32> to vector<16x288xf32>
    %c0_8 = arith.constant 0 : index
    %c0_9 = arith.constant 0 : index
    %c19 = arith.constant 19 : index
    %8 = vector.load %arg1[%c0_8, %c0_9, %c19] : memref<1x16x342xf32, #tpu.memory_space<vmem>>, vector<1x16x288xf32>
    %9 = vector.shape_cast %8 : vector<1x16x288xf32> to vector<16x288xf32>
    %c0_10 = arith.constant 0 : index
    %c0_11 = arith.constant 0 : index
    %c20 = arith.constant 20 : index
    %10 = vector.load %arg1[%c0_10, %c0_11, %c20] : memref<1x16x342xf32, #tpu.memory_space<vmem>>, vector<1x16x288xf32>
    %11 = vector.shape_cast %10 : vector<1x16x288xf32> to vector<16x288xf32>
    %c0_12 = arith.constant 0 : index
    %c0_13 = arith.constant 0 : index
    %c36 = arith.constant 36 : index
    %12 = vector.load %arg1[%c0_12, %c0_13, %c36] : memref<1x16x342xf32, #tpu.memory_space<vmem>>, vector<1x16x288xf32>
    %13 = vector.shape_cast %12 : vector<1x16x288xf32> to vector<16x288xf32>
    %c0_14 = arith.constant 0 : index
    %c0_15 = arith.constant 0 : index
    %c37 = arith.constant 37 : index
    %14 = vector.load %arg1[%c0_14, %c0_15, %c37] : memref<1x16x342xf32, #tpu.memory_space<vmem>>, vector<1x16x288xf32>
    %15 = vector.shape_cast %14 : vector<1x16x288xf32> to vector<16x288xf32>
    %c0_16 = arith.constant 0 : index
    %c0_17 = arith.constant 0 : index
    %c38 = arith.constant 38 : index
    %16 = vector.load %arg1[%c0_16, %c0_17, %c38] : memref<1x16x342xf32, #tpu.memory_space<vmem>>, vector<1x16x288xf32>
    %17 = vector.shape_cast %16 : vector<1x16x288xf32> to vector<16x288xf32>
    %18 = tpu.concatenate %1, %3, %5, %7, %9, %11, %13, %15, %17 in 0 : vector<16x288xf32>, vector<16x288xf32>, vector<16x288xf32>, vector<16x288xf32>, vector<16x288xf32>, vector<16x288xf32>, vector<16x288xf32>, vector<16x288xf32>, vector<16x288xf32> -> vector<144x288xf32>
    %c0_18 = arith.constant 0 : index
    %c0_19 = arith.constant 0 : index
    %19 = vector.load %arg4[%c0_18, %c0_19] : memref<1x288xf32, #tpu.memory_space<vmem>>, vector<1x288xf32>
    %c0_20 = arith.constant 0 : index
    %c0_21 = arith.constant 0 : index
    %20 = vector.load %arg2[%c0_20, %c0_21] : memref<16x144xf32, #tpu.memory_space<vmem>>, vector<16x144xf32>
    %cst = arith.constant dense<0.000000e+00> : vector<16x288xf32>
    %21 = tpu.matmul %20, %18, %cst {dimension_numbers = #tpu.dot_dimension_numbers<[1], [0], [0], [1], [0, 0, 1, 1], [], []>} : vector<16x144xf32>, vector<144x288xf32>, vector<16x288xf32> -> vector<16x288xf32>
    %22 = vector.broadcast %19 : vector<1x288xf32> to vector<16x288xf32>
    %23 = arith.mulf %21, %22 : vector<16x288xf32>
    %cst_22 = arith.constant dense<0.000000e+00> : vector<16xf32>
    %24 = vector.multi_reduction <add>, %23, %cst_22 [1] : vector<16x288xf32> to vector<16xf32>
    %25 = vector.shape_cast %24 : vector<16xf32> to vector<16x1xf32>
    %cst_23 = arith.constant 3.906250e-03 : f32
    %26 = vector.broadcast %cst_23 : f32 to vector<16x1xf32>
    %27 = arith.mulf %25, %26 : vector<16x1xf32>
    %28 = arith.mulf %23, %21 : vector<16x288xf32>
    %cst_24 = arith.constant dense<0.000000e+00> : vector<16xf32>
    %29 = vector.multi_reduction <add>, %28, %cst_24 [1] : vector<16x288xf32> to vector<16xf32>
    %30 = vector.shape_cast %29 : vector<16xf32> to vector<16x1xf32>
    %cst_25 = arith.constant 3.906250e-03 : f32
    %31 = vector.broadcast %cst_25 : f32 to vector<16x1xf32>
    %32 = arith.mulf %30, %31 : vector<16x1xf32>
    %33 = arith.mulf %27, %27 : vector<16x1xf32>
    %34 = arith.subf %32, %33 : vector<16x1xf32>
    %35 = vector.broadcast %27 : vector<16x1xf32> to vector<16x288xf32>
    %36 = arith.subf %21, %35 : vector<16x288xf32>
    %cst_26 = arith.constant 9.99999974E-6 : f32
    %37 = vector.broadcast %cst_26 : f32 to vector<16x1xf32>
    %38 = arith.addf %34, %37 : vector<16x1xf32>
    %39 = math.rsqrt %38 : vector<16x1xf32>
    %40 = vector.broadcast %39 : vector<16x1xf32> to vector<16x288xf32>
    %41 = arith.mulf %36, %40 : vector<16x288xf32>
    %cst_27 = arith.constant 0.000000e+00 : f32
    %42 = vector.broadcast %cst_27 : f32 to vector<16x288xf32>
    %43 = arith.maximumf %41, %42 : vector<16x288xf32>
    %c0_28 = arith.constant 0 : index
    %c0_29 = arith.constant 0 : index
    %44 = vector.load %arg3[%c0_28, %c0_29] : memref<16x16xf32, #tpu.memory_space<vmem>>, vector<16x16xf32>
    %cst_30 = arith.constant dense<0.000000e+00> : vector<16x288xf32>
    %45 = tpu.matmul %44, %43, %cst_30 {dimension_numbers = #tpu.dot_dimension_numbers<[1], [0], [0], [1], [0, 0, 1, 1], [], []>} : vector<16x16xf32>, vector<16x288xf32>, vector<16x288xf32> -> vector<16x288xf32>
    %46 = vector.broadcast %19 : vector<1x288xf32> to vector<16x288xf32>
    %47 = arith.mulf %45, %46 : vector<16x288xf32>
    %cst_31 = arith.constant dense<0.000000e+00> : vector<16xf32>
    %48 = vector.multi_reduction <add>, %47, %cst_31 [1] : vector<16x288xf32> to vector<16xf32>
    %49 = vector.shape_cast %48 : vector<16xf32> to vector<16x1xf32>
    %cst_32 = arith.constant 3.906250e-03 : f32
    %50 = vector.broadcast %cst_32 : f32 to vector<16x1xf32>
    %51 = arith.mulf %49, %50 : vector<16x1xf32>
    %52 = arith.mulf %47, %45 : vector<16x288xf32>
    %cst_33 = arith.constant dense<0.000000e+00> : vector<16xf32>
    %53 = vector.multi_reduction <add>, %52, %cst_33 [1] : vector<16x288xf32> to vector<16xf32>
    %54 = vector.shape_cast %53 : vector<16xf32> to vector<16x1xf32>
    %cst_34 = arith.constant 3.906250e-03 : f32
    %55 = vector.broadcast %cst_34 : f32 to vector<16x1xf32>
    %56 = arith.mulf %54, %55 : vector<16x1xf32>
    %57 = arith.mulf %51, %51 : vector<16x1xf32>
    %58 = arith.subf %56, %57 : vector<16x1xf32>
    %59 = vector.broadcast %51 : vector<16x1xf32> to vector<16x288xf32>
    %60 = arith.subf %45, %59 : vector<16x288xf32>
    %cst_35 = arith.constant 9.99999974E-6 : f32
    %61 = vector.broadcast %cst_35 : f32 to vector<16x1xf32>
    %62 = arith.addf %58, %61 : vector<16x1xf32>
    %63 = math.rsqrt %62 : vector<16x1xf32>
    %64 = vector.broadcast %63 : vector<16x1xf32> to vector<16x288xf32>
    %65 = arith.mulf %60, %64 : vector<16x288xf32>
    %cst_36 = arith.constant 0.000000e+00 : f32
    %66 = vector.broadcast %cst_36 : f32 to vector<16x288xf32>
    %67 = arith.maximumf %65, %66 : vector<16x288xf32>
    %c0_37 = arith.constant 0 : index
    %c0_38 = arith.constant 0 : index
    %c0_39 = arith.constant 0 : index
    %68 = vector.load %arg5[%c0_37, %c0_38, %c0_39] : memref<1x16x288xf32, #tpu.memory_space<vmem>>, vector<1x16x288xf32>
    %69 = vector.shape_cast %68 : vector<1x16x288xf32> to vector<16x288xf32>
    %70 = vector.shape_cast %67 : vector<16x288xf32> to vector<1x16x288xf32>
    tpu.vector_store %arg5[%c0_37, %c0_38, %c0_39], %70 {strides = array<i32>} : memref<1x16x288xf32, #tpu.memory_space<vmem>>, vector<1x16x288xf32>,
    return
  }
  func.func @transform_0(%arg0: i32) -> (i32, i32, i32) {
    %c0_i32 = arith.constant 0 : i32
    %c0_i32_0 = arith.constant 0 : i32
    %c0_i32_1 = arith.constant 0 : i32
    return %arg0, %c0_i32, %c0_i32_0 : i32, i32, i32
  }
  func.func @transform_1(%arg0: i32) -> (i32, i32) {
    %c0_i32 = arith.constant 0 : i32
    %c0_i32_0 = arith.constant 0 : i32
    %c0_i32_1 = arith.constant 0 : i32
    return %c0_i32, %c0_i32_0 : i32, i32
  }
  func.func @transform_2(%arg0: i32) -> (i32, i32) {
    %c0_i32 = arith.constant 0 : i32
    %c0_i32_0 = arith.constant 0 : i32
    %c0_i32_1 = arith.constant 0 : i32
    return %c0_i32, %c0_i32_0 : i32, i32
  }
  func.func @transform_3(%arg0: i32) -> (i32, i32) {
    %c0_i32 = arith.constant 0 : i32
    %c0_i32_0 = arith.constant 0 : i32
    %c0_i32_1 = arith.constant 0 : i32
    return %c0_i32, %c0_i32_0 : i32, i32
  }
  func.func @transform_4(%arg0: i32) -> (i32, i32, i32) {
    %c0_i32 = arith.constant 0 : i32
    %c0_i32_0 = arith.constant 0 : i32
    %c0_i32_1 = arith.constant 0 : i32
    return %arg0, %c0_i32, %c0_i32_0 : i32, i32, i32
  }
}

</mosaic_0001>

<llo_original>
// kernel: mixconv_pallas.1
$region0: #{mixconv_pallas.1}
  #allocation0 [shape = 'u32[]', space=smem, size = 0x4, offset = 0x4, fixed_abs, tag = 'smem constant byte address 0x4 - core index']
  #allocation1 [shape = 'u32[144,128]{1,0:T(1,128)}', space=vmem, size = 0x12000, scoped, tag = 'internal scratch']
  %s0 = inlined_call_operand.vmem [shape: f32[2,16,342], index: 0, kind: input, shape index: {}]
  %s1 = inlined_call_operand.vmem [shape: f32[16,144], index: 1, kind: input, shape index: {}]
  %s2 = inlined_call_operand.vmem [shape: f32[16,16], index: 2, kind: input, shape index: {}]
  %s3 = inlined_call_operand.vmem [shape: f32[1,288], index: 3, kind: input, shape index: {}]
  %s4 = inlined_call_operand.vmem [shape: f32[2,16,288], index: 4, kind: output, shape index: {}]
  %s5 = sld [smem:[#allocation0]]
  $region49: #{mixconv_pallas.1} parent=0
    _
  %s7 = ssub.s32 1, %s5
  %s8 = scalar_select 0, %s7, %s5
  loop: start=0, step=1, limit=4
  $region2: #{mixconv_pallas.1} parent=0 // loop_pre_header
    _
  $region3: #{mixconv_pallas.1} parent=0 // loop_header
    %s10 = sphi 0, %s14
    %p11 = scmp.ge.s32.totalorder %s10, 4
    %s20 = sphi 0, %s22
    %s23 = sphi 0, %s20
    %s24 = sphi 0, %s23
    %s40 = sphi 0, %s24
    %s44 = sphi 0, %s44
    %s46 = sphi 0, %s44
    %s47 = sphi 0, %s46
    %s61 = sphi 0, %s47
    %s65 = sphi 0, %s65
    %s67 = sphi 0, %s65
    %s68 = sphi 0, %s67
    %s82 = sphi 0, %s68
    %s86 = sphi 0, %s86
    %s88 = sphi 0, %s86
    %s89 = sphi 0, %s88
    %s103 = sphi 0, %s89
    %s109 = sphi 0, %s111
    %s112 = sphi 0, %s109
    %s113 = sphi 0, %s112
    %s129 = sphi 0, %s113
  $region4: #{mixconv_pallas.1} parent=0 // loop_header_branch
    %13 = sbr.rel (%p11) target = $region8
  $region5: #{mixconv_pallas.1} parent=0 // loop_body
    %s15 = ssub.s32 %s10, 1
    %s16 = ssub.s32 %s10, 2
    %s17 = sadd.s32 %s10, 1
    %s18 = ssub.s32 %s10, %s17
    %p19 = scmp.eq.s32.totalorder %s18, 0
    %s21 = sadd.s32 %s20, 1
    %s22 = scalar_select %p19, %s20, %s21
    %p25 = pneg %p19
    %p26 = scmp.eq.s32.totalorder %s10, 1
    %p27 = por %p25, %p26
    %p28 = scmp.ne.s32.totalorder %s20, %s23
    %p29 = scmp.eq.s32.totalorder %s10, 0
    %p30 = por %p28, %p29
    %p31 = scmp.ne.s32.totalorder %s20, %s23
    %p32 = scmp.eq.s32.totalorder %s15, 1
    %p33 = por %p31, %p32
    %p34 = scmp.ne.s32.totalorder %s23, %s24
    %p35 = scmp.eq.s32.totalorder %s15, 0
    %p36 = por %p34, %p35
    %p37 = scmp.ne.s32.totalorder %s23, %s24
    %p38 = scmp.eq.s32.totalorder %s16, 1
    %p39 = por %p37, %p38
    %p41 = scmp.ne.s32.totalorder %s24, %s40
    %p42 = scmp.eq.s32.totalorder %s16, 0
    %p43 = por %p41, %p42
    %s45 = sadd.s32 %s44, 1
    %p48 = scmp.eq.s32.totalorder %s10, 1
    %p49 = scmp.ne.s32.totalorder %s44, %s46
    %p50 = scmp.eq.s32.totalorder %s10, 0
    %p51 = por %p49, %p50
    %p52 = scmp.ne.s32.totalorder %s44, %s46
    %p53 = scmp.eq.s32.totalorder %s15, 1
    %p54 = por %p52, %p53
    %p55 = scmp.ne.s32.totalorder %s46, %s47
    %p56 = scmp.eq.s32.totalorder %s15, 0
    %p57 = por %p55, %p56
    %p58 = scmp.ne.s32.totalorder %s46, %s47
    %p59 = scmp.eq.s32.totalorder %s16, 1
    %p60 = por %p58, %p59
    %p62 = scmp.ne.s32.totalorder %s47, %s61
    %p63 = scmp.eq.s32.totalorder %s16, 0
    %p64 = por %p62, %p63
    %s66 = sadd.s32 %s65, 1
    %p69 = scmp.eq.s32.totalorder %s10, 1
    %p70 = scmp.ne.s32.totalorder %s65, %s67
    %p71 = scmp.eq.s32.totalorder %s10, 0
    %p72 = por %p70, %p71
    %p73 = scmp.ne.s32.totalorder %s65, %s67
    %p74 = scmp.eq.s32.totalorder %s15, 1
    %p75 = por %p73, %p74
    %p76 = scmp.ne.s32.totalorder %s67, %s68
    %p77 = scmp.eq.s32.totalorder %s15, 0
    %p78 = por %p76, %p77
    %p79 = scmp.ne.s32.totalorder %s67, %s68
    %p80 = scmp.eq.s32.totalorder %s16, 1
    %p81 = por %p79, %p80
    %p83 = scmp.ne.s32.totalorder %s68, %s82
    %p84 = scmp.eq.s32.totalorder %s16, 0
    %p85 = por %p83, %p84
    %s87 = sadd.s32 %s86, 1
    %p90 = scmp.eq.s32.totalorder %s10, 1
    %p91 = scmp.ne.s32.totalorder %s86, %s88
    %p92 = scmp.eq.s32.totalorder %s10, 0
    %p93 = por %p91, %p92
    %p94 = scmp.ne.s32.totalorder %s86, %s88
    %p95 = scmp.eq.s32.totalorder %s15, 1
    %p96 = por %p94, %p95
    %p97 = scmp.ne.s32.totalorder %s88, %s89
    %p98 = scmp.eq.s32.totalorder %s15, 0
    %p99 = por %p97, %p98
    %p100 = scmp.ne.s32.totalorder %s88, %s89
    %p101 = scmp.eq.s32.totalorder %s16, 1
    %p102 = por %p100, %p101
    %p104 = scmp.ne.s32.totalorder %s89, %s103
    %p105 = scmp.eq.s32.totalorder %s16, 0
    %p106 = por %p104, %p105
    %s107 = ssub.s32 %s10, %s17
    %p108 = scmp.eq.s32.totalorder %s107, 0
    %s110 = sadd.s32 %s109, 1
    %s111 = scalar_select %p108, %s109, %s110
    %p114 = pneg %p108
    %p115 = scmp.eq.s32.totalorder %s10, 1
    %p116 = por %p114, %p115
    %p117 = scmp.ne.s32.totalorder %s109, %s112
    %p118 = scmp.eq.s32.totalorder %s10, 0
    %p119 = por %p117, %p118
    %p120 = scmp.ne.s32.totalorder %s109, %s112
    %p121 = scmp.eq.s32.totalorder %s15, 1
    %p122 = por %p120, %p121
    %p123 = scmp.ne.s32.totalorder %s112, %s113
    %p124 = scmp.eq.s32.totalorder %s15, 0
    %p125 = por %p123, %p124
    %p126 = scmp.ne.s32.totalorder %s112, %s113
    %p127 = scmp.eq.s32.totalorder %s16, 1
    %p128 = por %p126, %p127
    %p130 = scmp.ne.s32.totalorder %s113, %s129
    %p131 = scmp.eq.s32.totalorder %s16, 0
    %p132 = por %p130, %p131
    %p133 = scmp.le.s32.totalorder 1, %s10
    %p134 = scmp.lt.s32.totalorder %s10, 3
    %p135 = pnand %p133, %p134
    %p136 = pneg %p135
    // Predicated region
    $region9: #{mixconv_pallas.1} parent=5 // pred_check
      _
    $region10: #{mixconv_pallas.1} parent=5 // pred_check_branch
      %138 = sbr.rel (%p135) target = $region12
    $region11: #{mixconv_pallas.1} parent=5 // pred_region
      %s139 = ssub.s32 %s10, 1
      // Predicated region
      $region13: #{mixconv_pallas.1} parent=11 // pred_check
        %p140 = pneg %p57
      $region14: #{mixconv_pallas.1} parent=11 // pred_check_branch
        %142 = sbr.rel (%p140) target = $region16
      $region15: #{mixconv_pallas.1} parent=11 // pred_region
        _
      $region16: #{mixconv_pallas.1} parent=11 // pred_fallthru
        _
      // Predicated region
      $region17: #{mixconv_pallas.1} parent=11 // pred_check
        %p143 = pneg %p78
      $region18: #{mixconv_pallas.1} parent=11 // pred_check_branch
        %145 = sbr.rel (%p143) target = $region20
      $region19: #{mixconv_pallas.1} parent=11 // pred_region
        _
      $region20: #{mixconv_pallas.1} parent=11 // pred_fallthru
        _
      // Predicated region
      $region21: #{mixconv_pallas.1} parent=11 // pred_check
        %p146 = pneg %p99
      $region22: #{mixconv_pallas.1} parent=11 // pred_check_branch
        %148 = sbr.rel (%p146) target = $region24
      $region23: #{mixconv_pallas.1} parent=11 // pred_region
        _
      $region24: #{mixconv_pallas.1} parent=11 // pred_fallthru
        _
    $region12: #{mixconv_pallas.1} parent=5 // pred_fallthru
      _
    %p149 = scmp.lt.s32.totalorder %s10, 2
    // Predicated region
    $region25: #{mixconv_pallas.1} parent=5 // pred_check
      %p150 = pneg %p149
    $region26: #{mixconv_pallas.1} parent=5 // pred_check_branch
      %152 = sbr.rel (%p150) target = $region28
    $region27: #{mixconv_pallas.1} parent=5 // pred_region
      // Predicated region
      $region29: #{mixconv_pallas.1} parent=27 // pred_check
        %p153 = pneg %p30
      $region30: #{mixconv_pallas.1} parent=27 // pred_check_branch
        %155 = sbr.rel (%p153) target = $region32
      $region31: #{mixconv_pallas.1} parent=27 // pred_region
        %p156 = scmp.lt.s32.totalorder %s10, 1
        %s157 = scalar_select %p156, %s10, 1
        %s158 = smul.addr %s157, 6
        %s159 = smul.addr %s158, 8
        %s160 = scalar_lea.vmem %s0, %s159
      $region32: #{mixconv_pallas.1} parent=27 // pred_fallthru
        _
    $region28: #{mixconv_pallas.1} parent=5 // pred_fallthru
      _
    %p161 = scmp.le.s32.totalorder 1, %s10
    %p162 = scmp.lt.s32.totalorder %s10, 3
    %p163 = pnand %p161, %p162
    %p164 = pneg %p163
    // Predicated region
    $region33: #{mixconv_pallas.1} parent=5 // pred_check
      _
    $region34: #{mixconv_pallas.1} parent=5 // pred_check_branch
      %166 = sbr.rel (%p163) target = $region36
    $region35: #{mixconv_pallas.1} parent=5 // pred_region
      %s167 = ssub.s32 %s10, 1
      %p168 = scmp.lt.s32.totalorder %s15, 1
      %s169 = scalar_select %p168, %s15, 1
      %s170 = smul.addr %s169, 6
      %s171 = smul.addr %s170, 8
      %s172 = scalar_lea.vmem %s0, %s171
      %p173 = pneg %p36
      %p174 = pneg %p33
      %p175 = pneg %p57
      %p176 = pneg %p54
      %p177 = pneg %p78
      %p178 = pneg %p75
      %p179 = pneg %p99
      %p180 = pneg %p96
      %p181 = pneg %p125
      %p182 = pneg %p122
      %p183 = scmp.lt.s32.totalorder %s15, 1
      %s184 = scalar_select %p183, %s15, 1
      %s185 = smul.addr %s184, 6
      %s186 = smul.addr %s185, 8
      %s187 = scalar_lea.vmem %s4, %s186
      %p188 = scmp.lt.s32.totalorder %s15, 1
      %s189 = scalar_select %p188, %s15, 1
      %s190 = smul.addr %s189, 6
      %s191 = smul.addr %s190, 8
      %s192 = scalar_lea.vmem %s0, %s191
      %p193 = scmp.lt.s32.totalorder %s15, 1
      %s194 = scalar_select %p193, %s15, 1
      %s195 = smul.addr %s194, 6
      %s196 = smul.addr %s195, 8
      %s197 = scalar_lea.vmem %s4, %s196
      %v198 = vld [vmem:[%s192] sm:$0xff]
      %v199 = vld [vmem:[%s192 + $0x8] sm:$0xff]
      %v200 = vld [vmem:[%s192 + $0x10] sm:$0xff]
      %v201 = vld [vmem:[%s192 + $0x18] sm:$0xff]
      %v202 = vld [vmem:[%s192 + $0x20] sm:$0xff]
      %v203 = vld [vmem:[%s192 + $0x28] sm:$0xff]
      %210 = vrot.lane.b32.xlu0 %v198, 127
      %v211 = vpop.permute.xlu0 %210
      %212 = vrot.lane.b32.xlu0 %v199, 127
      %v213 = vpop.permute.xlu0 %212
      %214 = vrot.lane.b32.xlu0 %v200, 127
      %v215 = vpop.permute.xlu0 %214
      %216 = vrot.lane.b32.xlu0 %v201, 127
      %v217 = vpop.permute.xlu0 %216
      %218 = vrot.lane.b32.xlu0 %v202, 127
      %v219 = vpop.permute.xlu0 %218
      %220 = vrot.lane.b32.xlu0 %v203, 127
      %v221 = vpop.permute.xlu0 %220
      %vm222 = vcmask 1039360
      %v223 = vsel %vm222, %v211, %v213
      %v224 = vsel %vm222, %v213, %v215
      %v225 = vsel %vm222, %v217, %v219
      %v226 = vsel %vm222, %v219, %v221
      %233 = vrot.lane.b32.xlu0 %v198, 126
      %v234 = vpop.permute.xlu0 %233
      %235 = vrot.lane.b32.xlu0 %v199, 126
      %v236 = vpop.permute.xlu0 %235
      %237 = vrot.lane.b32.xlu0 %v200, 126
      %v238 = vpop.permute.xlu0 %237
      %239 = vrot.lane.b32.xlu0 %v201, 126
      %v240 = vpop.permute.xlu0 %239
      %241 = vrot.lane.b32.xlu0 %v202, 126
      %v242 = vpop.permute.xlu0 %241
      %243 = vrot.lane.b32.xlu0 %v203, 126
      %v244 = vpop.permute.xlu0 %243
      %vm245 = vcmask 1031168
      %v246 = vsel %vm245, %v234, %v236
      %v247 = vsel %vm245, %v236, %v238
      %v248 = vsel %vm245, %v240, %v242
      %v249 = vsel %vm245, %v242, %v244
      %256 = vrot.lane.b32.xlu0 %v198, 110
      %v257 = vpop.permute.xlu0 %256
      %258 = vrot.lane.b32.xlu0 %v199, 110
      %v259 = vpop.permute.xlu0 %258
      %260 = vrot.lane.b32.xlu0 %v200, 110
      %v261 = vpop.permute.xlu0 %260
      %262 = vrot.lane.b32.xlu0 %v201, 110
      %v263 = vpop.permute.xlu0 %262
      %264 = vrot.lane.b32.xlu0 %v202, 110
      %v265 = vpop.permute.xlu0 %264
      %266 = vrot.lane.b32.xlu0 %v203, 110
      %v267 = vpop.permute.xlu0 %266
      %vm268 = vcmask 900096
      %v269 = vsel %vm268, %v257, %v259
      %v270 = vsel %vm268, %v259, %v261
      %v271 = vsel %vm268, %v263, %v265
      %v272 = vsel %vm268, %v265, %v267
      %279 = vrot.lane.b32.xlu0 %v198, 109
      %v280 = vpop.permute.xlu0 %279
      %281 = vrot.lane.b32.xlu0 %v199, 109
      %v282 = vpop.permute.xlu0 %281
      %283 = vrot.lane.b32.xlu0 %v200, 109
      %v284 = vpop.permute.xlu0 %283
      %285 = vrot.lane.b32.xlu0 %v201, 109
      %v286 = vpop.permute.xlu0 %285
      %287 = vrot.lane.b32.xlu0 %v202, 109
      %v288 = vpop.permute.xlu0 %287
      %289 = vrot.lane.b32.xlu0 %v203, 109
      %v290 = vpop.permute.xlu0 %289
      %vm291 = vcmask 891904
      %v292 = vsel %vm291, %v280, %v282
      %v293 = vsel %vm291, %v282, %v284
      %v294 = vsel %vm291, %v286, %v288
      %v295 = vsel %vm291, %v288, %v290
      %302 = vrot.lane.b32.xlu0 %v198, 108
      %v303 = vpop.permute.xlu0 %302
      %304 = vrot.lane.b32.xlu0 %v199, 108
      %v305 = vpop.permute.xlu0 %304
      %306 = vrot.lane.b32.xlu0 %v200, 108
      %v307 = vpop.permute.xlu0 %306
      %308 = vrot.lane.b32.xlu0 %v201, 108
      %v309 = vpop.permute.xlu0 %308
      %310 = vrot.lane.b32.xlu0 %v202, 108
      %v311 = vpop.permute.xlu0 %310
      %312 = vrot.lane.b32.xlu0 %v203, 108
      %v313 = vpop.permute.xlu0 %312
      %vm314 = vcmask 883712
      %v315 = vsel %vm314, %v303, %v305
      %v316 = vsel %vm314, %v305, %v307
      %v317 = vsel %vm314, %v309, %v311
      %v318 = vsel %vm314, %v311, %v313
      %325 = vrot.lane.b32.xlu0 %v198, 92
      %v326 = vpop.permute.xlu0 %325
      %327 = vrot.lane.b32.xlu0 %v199, 92
      %v328 = vpop.permute.xlu0 %327
      %329 = vrot.lane.b32.xlu0 %v200, 92
      %v330 = vpop.permute.xlu0 %329
      %331 = vrot.lane.b32.xlu0 %v201, 92
      %v332 = vpop.permute.xlu0 %331
      %333 = vrot.lane.b32.xlu0 %v202, 92
      %v334 = vpop.permute.xlu0 %333
      %335 = vrot.lane.b32.xlu0 %v203, 92
      %v336 = vpop.permute.xlu0 %335
      %vm337 = vcmask 752640
      %v338 = vsel %vm337, %v326, %v328
      %v339 = vsel %vm337, %v328, %v330
      %v340 = vsel %vm337, %v332, %v334
      %v341 = vsel %vm337, %v334, %v336
      %348 = vrot.lane.b32.xlu0 %v198, 91
      %v349 = vpop.permute.xlu0 %348
      %350 = vrot.lane.b32.xlu0 %v199, 91
      %v351 = vpop.permute.xlu0 %350
      %352 = vrot.lane.b32.xlu0 %v200, 91
      %v353 = vpop.permute.xlu0 %352
      %354 = vrot.lane.b32.xlu0 %v201, 91
      %v355 = vpop.permute.xlu0 %354
      %356 = vrot.lane.b32.xlu0 %v202, 91
      %v357 = vpop.permute.xlu0 %356
      %358 = vrot.lane.b32.xlu0 %v203, 91
      %v359 = vpop.permute.xlu0 %358
      %vm360 = vcmask 744448
      %v361 = vsel %vm360, %v349, %v351
      %v362 = vsel %vm360, %v351, %v353
      %v363 = vsel %vm360, %v355, %v357
      %v364 = vsel %vm360, %v357, %v359
      %371 = vrot.lane.b32.xlu0 %v198, 90
      %v372 = vpop.permute.xlu0 %371
      %373 = vrot.lane.b32.xlu0 %v199, 90
      %v374 = vpop.permute.xlu0 %373
      %375 = vrot.lane.b32.xlu0 %v200, 90
      %v376 = vpop.permute.xlu0 %375
      %377 = vrot.lane.b32.xlu0 %v201, 90
      %v378 = vpop.permute.xlu0 %377
      %379 = vrot.lane.b32.xlu0 %v202, 90
      %v380 = vpop.permute.xlu0 %379
      %381 = vrot.lane.b32.xlu0 %v203, 90
      %v382 = vpop.permute.xlu0 %381
      %vm383 = vcmask 736256
      %v384 = vsel %vm383, %v372, %v374
      %v385 = vsel %vm383, %v374, %v376
      %v386 = vsel %vm383, %v378, %v380
      %v387 = vsel %vm383, %v380, %v382
      %v394 = vld [vmem:[%s3] sm:$0x7]
      %v395 = vld [vmem:[%s1] sm:$0xff]
      %v396 = vld [vmem:[%s1 + $0x8] sm:$0xff]
      %v397 = vld [vmem:[%s1 + $0x10] sm:$0xff]
      %v398 = vld [vmem:[%s1 + $0x18] sm:$0xff]
      %vm399 = vcmask 130048
      %v401 = vsel %vm399, %v396, 0
      %v404 = vsel %vm399, %v398, 0
      %406 = vmatprep.subr.mxu0 %v199
      %407 = vmatpush1.msra.mxu0 %v198
      %408 = vmatprep.subr.mxu0 %v202
      %409 = vmatpush1.msra.mxu0 %v201
      %410 = vmatprep.subr.mxu0 %v224
      %411 = vmatpush1.msra.mxu0 %v223
      %412 = vmatprep.subr.mxu0 %v226
      %413 = vmatpush1.msra.mxu0 %v225
      %414 = vmatprep.subr.mxu0 %v247
      %415 = vmatpush1.msra.mxu0 %v246
      %416 = vmatprep.subr.mxu0 %v249
      %417 = vmatpush1.msra.mxu0 %v248
      %418 = vmatprep.subr.mxu0 %v270
      %419 = vmatpush1.msra.mxu0 %v269
      %420 = vmatprep.subr.mxu0 %v272
      %421 = vmatpush1.msra.mxu0 %v271
      %422 = vmatprep.subr.mxu0 %v293
      %423 = vmatpush1.msra.mxu0 %v292
      %424 = vmatprep.subr.mxu0 %v295
      %425 = vmatpush1.msra.mxu0 %v294
      %426 = vmatprep.subr.mxu0 %v316
      %427 = vmatpush1.msra.mxu0 %v315
      %428 = vmatprep.subr.mxu0 %v318
      %429 = vmatpush1.msra.mxu0 %v317
      %430 = vmatprep.subr.mxu0 %v339
      %431 = vmatpush1.msra.mxu0 %v338
      %432 = vmatprep.subr.mxu0 %v341
      %433 = vmatpush1.msra.mxu0 %v340
      %434 = vmatprep.subr.mxu0 %v362
      %435 = vmatpush1.msra.mxu0 %v361
      %436 = vmatprep.subr.mxu0 %v364
      %437 = vmatpush1.msra.mxu0 %v363
      %438 = vmatprep.subr.mxu0 %v385
      %439 = vmatpush1.msra.mxu0 %v384
      %440 = vmatprep.subr.mxu0 %v387
      %441 = vmatpush1.msra.mxu0 %v386
      %442 = vmatprep.subr.mxu0 0.0
      %443 = vmatpush1.msra.mxu0 0.0
      %444 = vmatprep.subr.mxu0 0.0
      %445 = vmatpush1.msra.mxu0 0.0
      %446 = vmatprep.subr.mxu0 0.0
      %447 = vmatpush1.msra.mxu0 0.0
      %448 = vmatprep.subr.mxu0 0.0
      %449 = vmatpush1.msra.mxu0 0.0
      %450 = vmatprep.subr.mxu0 0.0
      %451 = vmatpush1.msra.mxu0 0.0
      %452 = vmatprep.subr.mxu0 0.0
      %453 = vmatpush1.msra.mxu0 0.0
      %454 = vmatprep.subr.mxu0 0.0
      %455 = vmatpush1.msra.mxu0 0.0
      %456 = vmatprep.subr.mxu0 0.0
      %457 = vmatpush1.msra.mxu0 0.0
      %458 = vmatprep.subr.mxu0 0.0
      %459 = vmatpush1.msra.mxu0 0.0
      %460 = vmatprep.subr.mxu0 0.0
      %461 = vmatpush1.msra.mxu0 0.0
      %462 = vmatprep.subr.mxu0 0.0
      %463 = vmatpush1.msra.mxu0 0.0
      %464 = vmatprep.subr.mxu0 0.0
      %465 = vmatpush1.msra.mxu0 0.0
      %466 = vmatprep.subr.mxu0 0.0
      %467 = vmatpush1.msra.mxu0 0.0
      %468 = vmatprep.subr.mxu0 0.0
      %469 = vmatpush1.msra.mxu0 0.0
      %470 = vmatprep.mubr.f32.mxu0 %v401
      %471 = vmatmul.mubr.f32.gmra.mrb[0].mxu0 %v395
      %v472 = vpop.f32.mrb[0].mxu0
      %v473 = vadd.f32 0.0, %v472
      %v474 = vpop.f32.mrb[0].mxu0
      %v475 = vadd.f32 0.0, %v474
      %476 = vmatprep.mubr.f32.mxu0 %v404
      %477 = vmatmul.mubr.f32.gmra.mrb[0].mxu0 %v397
      %v478 = vpop.f32.mrb[0].mxu0
      %v479 = vadd.f32 0.0, %v478
      %v480 = vpop.f32.mrb[0].mxu0
      %v481 = vadd.f32 0.0, %v480
      %482 = vdwg.mxu0
      %483 = vmatprep.subr.mxu0 0.0
      %484 = vmatpush1.msra.mxu0 %v200
      %485 = vmatprep.subr.mxu0 0.0
      %486 = vmatpush1.msra.mxu0 %v203
      %487 = vmatprep.subr.mxu0 0.0
      %488 = vmatpush1.msra.mxu0 %v215
      %489 = vmatprep.subr.mxu0 0.0
      %490 = vmatpush1.msra.mxu0 %v221
      %491 = vmatprep.subr.mxu0 0.0
      %492 = vmatpush1.msra.mxu0 %v238
      %493 = vmatprep.subr.mxu0 0.0
      %494 = vmatpush1.msra.mxu0 %v244
      %495 = vmatprep.subr.mxu0 0.0
      %496 = vmatpush1.msra.mxu0 %v261
      %497 = vmatprep.subr.mxu0 0.0
      %498 = vmatpush1.msra.mxu0 %v267
      %499 = vmatprep.subr.mxu0 0.0
      %500 = vmatpush1.msra.mxu0 %v284
      %501 = vmatprep.subr.mxu0 0.0
      %502 = vmatpush1.msra.mxu0 %v290
      %503 = vmatprep.subr.mxu0 0.0
      %504 = vmatpush1.msra.mxu0 %v307
      %505 = vmatprep.subr.mxu0 0.0
      %506 = vmatpush1.msra.mxu0 %v313
      %507 = vmatprep.subr.mxu0 0.0
      %508 = vmatpush1.msra.mxu0 %v330
      %509 = vmatprep.subr.mxu0 0.0
      %510 = vmatpush1.msra.mxu0 %v336
      %511 = vmatprep.subr.mxu0 0.0
      %512 = vmatpush1.msra.mxu0 %v353
      %513 = vmatprep.subr.mxu0 0.0
      %514 = vmatpush1.msra.mxu0 %v359
      %515 = vmatprep.subr.mxu0 0.0
      %516 = vmatpush1.msra.mxu0 %v376
      %517 = vmatprep.subr.mxu0 0.0
      %518 = vmatpush1.msra.mxu0 %v382
      %519 = vmatprep.subr.mxu0 0.0
      %520 = vmatpush1.msra.mxu0 0.0
      %521 = vmatprep.subr.mxu0 0.0
      %522 = vmatpush1.msra.mxu0 0.0
      %523 = vmatprep.subr.mxu0 0.0
      %524 = vmatpush1.msra.mxu0 0.0
      %525 = vmatprep.subr.mxu0 0.0
      %526 = vmatpush1.msra.mxu0 0.0
      %527 = vmatprep.subr.mxu0 0.0
      %528 = vmatpush1.msra.mxu0 0.0
      %529 = vmatprep.subr.mxu0 0.0
      %530 = vmatpush1.msra.mxu0 0.0
      %531 = vmatprep.subr.mxu0 0.0
      %532 = vmatpush1.msra.mxu0 0.0
      %533 = vmatprep.subr.mxu0 0.0
      %534 = vmatpush1.msra.mxu0 0.0
      %535 = vmatprep.subr.mxu0 0.0
      %536 = vmatpush1.msra.mxu0 0.0
      %537 = vmatprep.subr.mxu0 0.0
      %538 = vmatpush1.msra.mxu0 0.0
      %539 = vmatprep.subr.mxu0 0.0
      %540 = vmatpush1.msra.mxu0 0.0
      %541 = vmatprep.subr.mxu0 0.0
      %542 = vmatpush1.msra.mxu0 0.0
      %543 = vmatprep.subr.mxu0 0.0
      %544 = vmatpush1.msra.mxu0 0.0
      %545 = vmatprep.subr.mxu0 0.0
      %546 = vmatpush1.msra.mxu0 0.0
      %547 = vmatprep.mubr.f32.mxu0 %v401
      %548 = vmatmul.mubr.f32.gmra.mrb[0].mxu0 %v395
      %v549 = vpop.f32.mrb[0].mxu0
      %v550 = vadd.f32 0.0, %v549
      %v551 = vpop.f32.mrb[0].mxu0
      %552 = vmatprep.mubr.f32.mxu0 %v404
      %553 = vmatmul.mubr.f32.gmra.mrb[0].mxu0 %v397
      %v554 = vpop.f32.mrb[0].mxu0
      %v555 = vadd.f32 0.0, %v554
      %v556 = vpop.f32.mrb[0].mxu0
      %557 = vdwg.mxu0
      %v559 = vlaneseq
      %v560 = vshrl.u32 %v559, 7
      %v561 = vsub.s32 0, %v560
      %v562 = vrot.slane %v394, %v561
      %v563 = vlaneseq
      %v564 = vshrl.u32 %v563, 7
      %v565 = vsub.s32 1, %v564
      %v566 = vrot.slane %v394, %v565
      %v567 = vlaneseq
      %v568 = vshrl.u32 %v567, 7
      %v569 = vsub.s32 2, %v568
      %v570 = vrot.slane %v394, %v569
      %v574 = vmul.f32 %v473, %v562
      %v575 = vmul.f32 %v475, %v566
      %v576 = vmul.f32 %v550, %v570
      %v577 = vmul.f32 %v479, %v562
      %v578 = vmul.f32 %v481, %v566
      %v579 = vmul.f32 %v555, %v570
      %v580 = vadd.f32 %v574, %v575
      %vm581 = vcmask 261120
      %v582 = vsel %vm581, %v576, 0.0
      %v583 = vadd.f32 %v580, %v582
      %584 = vadd.xlane.f32.xlu0 %v583
      %v585 = vpop.xlane.xlu0 %584
      %v586 = vadd.f32 %v577, %v578
      %v587 = vsel %vm581, %v579, 0.0
      %v588 = vadd.f32 %v586, %v587
      %589 = vadd.xlane.f32.xlu0 %v588
      %v590 = vpop.xlane.xlu0 %589
      %v591 = vmul.f32 %v585, 0.00390625
      %v592 = vmul.f32 %v590, 0.00390625
      %v593 = vmul.f32 %v574, %v473
      %v594 = vmul.f32 %v575, %v475
      %v595 = vmul.f32 %v576, %v550
      %v596 = vmul.f32 %v577, %v479
      %v597 = vmul.f32 %v578, %v481
      %v598 = vmul.f32 %v579, %v555
      %v599 = vadd.f32 %v593, %v594
      %v600 = vsel %vm581, %v595, 0.0
      %v601 = vadd.f32 %v599, %v600
      %602 = vadd.xlane.f32.xlu0 %v601
      %v603 = vpop.xlane.xlu0 %602
      %v604 = vadd.f32 %v596, %v597
      %v605 = vsel %vm581, %v598, 0.0
      %v606 = vadd.f32 %v604, %v605
      %607 = vadd.xlane.f32.xlu0 %v606
      %v608 = vpop.xlane.xlu0 %607
      %v609 = vmul.f32 %v603, 0.00390625
      %v610 = vmul.f32 %v608, 0.00390625
      %v611 = vmul.f32 %v591, %v591
      %v612 = vmul.f32 %v592, %v592
      %v613 = vsub.f32 %v609, %v611
      %v614 = vsub.f32 %v610, %v612
      %v615 = vsub.f32 %v473, %v591
      %v616 = vsub.f32 %v475, %v591
      %v617 = vsub.f32 %v550, %v591
      %v618 = vsub.f32 %v479, %v592
      %v619 = vsub.f32 %v481, %v592
      %v620 = vsub.f32 %v555, %v592
      %v621 = vadd.f32 %v613, 1e-05
      %v622 = vadd.f32 %v614, 1e-05
      %v623 = vrsqrt.pop %v621
      %v624 = vrsqrt.pop %v622
      %v625 = vmul.f32 %v615, %v623
      %v626 = vmul.f32 %v616, %v623
      %v627 = vmul.f32 %v617, %v623
      %v628 = vmul.f32 %v618, %v624
      %v629 = vmul.f32 %v619, %v624
      %v630 = vmul.f32 %v620, %v624
      %v631 = vmax.f32 %v625, 0.0
      %v632 = vmax.f32 %v626, 0.0
      %v633 = vmax.f32 %v627, 0.0
      %v634 = vmax.f32 %v628, 0.0
      %v635 = vmax.f32 %v629, 0.0
      %v636 = vmax.f32 %v630, 0.0
      %v637 = vld [vmem:[%s2] sm:$0xff]
      %v638 = vld [vmem:[%s2 + $0x8] sm:$0xff]
      %v640 = vsel %vm399, %v637, 0
      %v643 = vsel %vm399, %v638, 0
      %645 = vmatprep.subr.mxu0 %v632
      %646 = vmatpush1.msra.mxu0 %v631
      %647 = vmatprep.subr.mxu0 %v635
      %648 = vmatpush1.msra.mxu0 %v634
      %649 = vmatprep.subr.mxu0 0.0
      %650 = vmatpush1.msra.mxu0 0.0
      %651 = vmatprep.subr.mxu0 0.0
      %652 = vmatpush1.msra.mxu0 0.0
      %653 = vmatprep.subr.mxu0 0.0
      %654 = vmatpush1.msra.mxu0 0.0
      %655 = vmatprep.subr.mxu0 0.0
      %656 = vmatpush1.msra.mxu0 0.0
      %657 = vmatprep.subr.mxu0 0.0
      %658 = vmatpush1.msra.mxu0 0.0
      %659 = vmatprep.subr.mxu0 0.0
      %660 = vmatpush1.msra.mxu0 0.0
      %661 = vmatprep.subr.mxu0 0.0
      %662 = vmatpush1.msra.mxu0 0.0
      %663 = vmatprep.subr.mxu0 0.0
      %664 = vmatpush1.msra.mxu0 0.0
      %665 = vmatprep.subr.mxu0 0.0
      %666 = vmatpush1.msra.mxu0 0.0
      %667 = vmatprep.subr.mxu0 0.0
      %668 = vmatpush1.msra.mxu0 0.0
      %669 = vmatprep.subr.mxu0 0.0
      %670 = vmatpush1.msra.mxu0 0.0
      %671 = vmatprep.subr.mxu0 0.0
      %672 = vmatpush1.msra.mxu0 0.0
      %673 = vmatprep.subr.mxu0 0.0
      %674 = vmatpush1.msra.mxu0 0.0
      %675 = vmatprep.subr.mxu0 0.0
      %676 = vmatpush1.msra.mxu0 0.0
      %677 = vmatprep.subr.mxu0 0.0
      %678 = vmatpush1.msra.mxu0 0.0
      %679 = vmatprep.subr.mxu0 0.0
      %680 = vmatpush1.msra.mxu0 0.0
      %681 = vmatprep.subr.mxu0 0.0
      %682 = vmatpush1.msra.mxu0 0.0
      %683 = vmatprep.subr.mxu0 0.0
      %684 = vmatpush1.msra.mxu0 0.0
      %685 = vmatprep.subr.mxu0 0.0
      %686 = vmatpush1.msra.mxu0 0.0
      %687 = vmatprep.subr.mxu0 0.0
      %688 = vmatpush1.msra.mxu0 0.0
      %689 = vmatprep.subr.mxu0 0.0
      %690 = vmatpush1.msra.mxu0 0.0
      %691 = vmatprep.subr.mxu0 0.0
      %692 = vmatpush1.msra.mxu0 0.0
      %693 = vmatprep.subr.mxu0 0.0
      %694 = vmatpush1.msra.mxu0 0.0
      %695 = vmatprep.subr.mxu0 0.0
      %696 = vmatpush1.msra.mxu0 0.0
      %697 = vmatprep.subr.mxu0 0.0
      %698 = vmatpush1.msra.mxu0 0.0
      %699 = vmatprep.subr.mxu0 0.0
      %700 = vmatpush1.msra.mxu0 0.0
      %701 = vmatprep.subr.mxu0 0.0
      %702 = vmatpush1.msra.mxu0 0.0
      %703 = vmatprep.subr.mxu0 0.0
      %704 = vmatpush1.msra.mxu0 0.0
      %705 = vmatprep.subr.mxu0 0.0
      %706 = vmatpush1.msra.mxu0 0.0
      %707 = vmatprep.subr.mxu0 0.0
      %708 = vmatpush1.msra.mxu0 0.0
      %709 = vmatprep.mubr.f32.mxu0 0.0
      %710 = vmatmul.mubr.f32.gmra.mrb[0].mxu0 %v640
      %v711 = vpop.f32.mrb[0].mxu0
      %v712 = vadd.f32 0.0, %v711
      %v713 = vpop.f32.mrb[0].mxu0
      %v714 = vadd.f32 0.0, %v713
      %715 = vmatprep.mubr.f32.mxu0 0.0
      %716 = vmatmul.mubr.f32.gmra.mrb[0].mxu0 %v643
      %v717 = vpop.f32.mrb[0].mxu0
      %v718 = vadd.f32 0.0, %v717
      %v719 = vpop.f32.mrb[0].mxu0
      %v720 = vadd.f32 0.0, %v719
      %721 = vdwg.mxu0
      %722 = vmatprep.subr.mxu0 0.0
      %723 = vmatpush1.msra.mxu0 %v633
      %724 = vmatprep.subr.mxu0 0.0
      %725 = vmatpush1.msra.mxu0 %v636
      %726 = vmatprep.subr.mxu0 0.0
      %727 = vmatpush1.msra.mxu0 0.0
      %728 = vmatprep.subr.mxu0 0.0
      %729 = vmatpush1.msra.mxu0 0.0
      %730 = vmatprep.subr.mxu0 0.0
      %731 = vmatpush1.msra.mxu0 0.0
      %732 = vmatprep.subr.mxu0 0.0
      %733 = vmatpush1.msra.mxu0 0.0
      %734 = vmatprep.subr.mxu0 0.0
      %735 = vmatpush1.msra.mxu0 0.0
      %736 = vmatprep.subr.mxu0 0.0
      %737 = vmatpush1.msra.mxu0 0.0
      %738 = vmatprep.subr.mxu0 0.0
      %739 = vmatpush1.msra.mxu0 0.0
      %740 = vmatprep.subr.mxu0 0.0
      %741 = vmatpush1.msra.mxu0 0.0
      %742 = vmatprep.subr.mxu0 0.0
      %743 = vmatpush1.msra.mxu0 0.0
      %744 = vmatprep.subr.mxu0 0.0
      %745 = vmatpush1.msra.mxu0 0.0
      %746 = vmatprep.subr.mxu0 0.0
      %747 = vmatpush1.msra.mxu0 0.0
      %748 = vmatprep.subr.mxu0 0.0
      %749 = vmatpush1.msra.mxu0 0.0
      %750 = vmatprep.subr.mxu0 0.0
      %751 = vmatpush1.msra.mxu0 0.0
      %752 = vmatprep.subr.mxu0 0.0
      %753 = vmatpush1.msra.mxu0 0.0
      %754 = vmatprep.subr.mxu0 0.0
      %755 = vmatpush1.msra.mxu0 0.0
      %756 = vmatprep.subr.mxu0 0.0
      %757 = vmatpush1.msra.mxu0 0.0
      %758 = vmatprep.subr.mxu0 0.0
      %759 = vmatpush1.msra.mxu0 0.0
      %760 = vmatprep.subr.mxu0 0.0
      %761 = vmatpush1.msra.mxu0 0.0
      %762 = vmatprep.subr.mxu0 0.0
      %763 = vmatpush1.msra.mxu0 0.0
      %764 = vmatprep.subr.mxu0 0.0
      %765 = vmatpush1.msra.mxu0 0.0
      %766 = vmatprep.subr.mxu0 0.0
      %767 = vmatpush1.msra.mxu0 0.0
      %768 = vmatprep.subr.mxu0 0.0
      %769 = vmatpush1.msra.mxu0 0.0
      %770 = vmatprep.subr.mxu0 0.0
      %771 = vmatpush1.msra.mxu0 0.0
      %772 = vmatprep.subr.mxu0 0.0
      %773 = vmatpush1.msra.mxu0 0.0
      %774 = vmatprep.subr.mxu0 0.0
      %775 = vmatpush1.msra.mxu0 0.0
      %776 = vmatprep.subr.mxu0 0.0
      %777 = vmatpush1.msra.mxu0 0.0
      %778 = vmatprep.subr.mxu0 0.0
      %779 = vmatpush1.msra.mxu0 0.0
      %780 = vmatprep.subr.mxu0 0.0
      %781 = vmatpush1.msra.mxu0 0.0
      %782 = vmatprep.subr.mxu0 0.0
      %783 = vmatpush1.msra.mxu0 0.0
      %784 = vmatprep.subr.mxu0 0.0
      %785 = vmatpush1.msra.mxu0 0.0
      %786 = vmatprep.mubr.f32.mxu0 0.0
      %787 = vmatmul.mubr.f32.gmra.mrb[0].mxu0 %v640
      %v788 = vpop.f32.mrb[0].mxu0
      %v789 = vadd.f32 0.0, %v788
      %v790 = vpop.f32.mrb[0].mxu0
      %791 = vmatprep.mubr.f32.mxu0 0.0
      %792 = vmatmul.mubr.f32.gmra.mrb[0].mxu0 %v643
      %v793 = vpop.f32.mrb[0].mxu0
      %v794 = vadd.f32 0.0, %v793
      %v795 = vpop.f32.mrb[0].mxu0
      %796 = vdwg.mxu0
      %v797 = vmul.f32 %v712, %v562
      %v798 = vmul.f32 %v714, %v566
      %v799 = vmul.f32 %v789, %v570
      %v800 = vmul.f32 %v718, %v562
      %v801 = vmul.f32 %v720, %v566
      %v802 = vmul.f32 %v794, %v570
      %v803 = vadd.f32 %v797, %v798
      %v804 = vsel %vm581, %v799, 0.0
      %v805 = vadd.f32 %v803, %v804
      %806 = vadd.xlane.f32.xlu0 %v805
      %v807 = vpop.xlane.xlu0 %806
      %v808 = vadd.f32 %v800, %v801
      %v809 = vsel %vm581, %v802, 0.0
      %v810 = vadd.f32 %v808, %v809
      %811 = vadd.xlane.f32.xlu0 %v810
      %v812 = vpop.xlane.xlu0 %811
      %v813 = vmul.f32 %v807, 0.00390625
      %v814 = vmul.f32 %v812, 0.00390625
      %v815 = vmul.f32 %v797, %v712
      %v816 = vmul.f32 %v798, %v714
      %v817 = vmul.f32 %v799, %v789
      %v818 = vmul.f32 %v800, %v718
      %v819 = vmul.f32 %v801, %v720
      %v820 = vmul.f32 %v802, %v794
      %v821 = vadd.f32 %v815, %v816
      %v822 = vsel %vm581, %v817, 0.0
      %v823 = vadd.f32 %v821, %v822
      %824 = vadd.xlane.f32.xlu0 %v823
      %v825 = vpop.xlane.xlu0 %824
      %v826 = vadd.f32 %v818, %v819
      %v827 = vsel %vm581, %v820, 0.0
      %v828 = vadd.f32 %v826, %v827
      %829 = vadd.xlane.f32.xlu0 %v828
      %v830 = vpop.xlane.xlu0 %829
      %v831 = vmul.f32 %v825, 0.00390625
      %v832 = vmul.f32 %v830, 0.00390625
      %v833 = vmul.f32 %v813, %v813
      %v834 = vmul.f32 %v814, %v814
      %v835 = vsub.f32 %v831, %v833
      %v836 = vsub.f32 %v832, %v834
      %v837 = vsub.f32 %v712, %v813
      %v838 = vsub.f32 %v714, %v813
      %v839 = vsub.f32 %v789, %v813
      %v840 = vsub.f32 %v718, %v814
      %v841 = vsub.f32 %v720, %v814
      %v842 = vsub.f32 %v794, %v814
      %v843 = vadd.f32 %v835, 1e-05
      %v844 = vadd.f32 %v836, 1e-05
      %v845 = vrsqrt.pop %v843
      %v846 = vrsqrt.pop %v844
      %v847 = vmul.f32 %v837, %v845
      %v848 = vmul.f32 %v838, %v845
      %v849 = vmul.f32 %v839, %v845
      %v850 = vmul.f32 %v840, %v846
      %v851 = vmul.f32 %v841, %v846
      %v852 = vmul.f32 %v842, %v846
      %v853 = vmax.f32 %v847, 0.0
      %v854 = vmax.f32 %v848, 0.0
      %v855 = vmax.f32 %v849, 0.0
      %v856 = vmax.f32 %v850, 0.0
      %v857 = vmax.f32 %v851, 0.0
      %v858 = vmax.f32 %v852, 0.0
      %859 = vst [vmem:[%s197] sm:$0xff] %v853
      %860 = vst [vmem:[%s197 + $0x8] sm:$0xff] %v854
      %861 = vst.msk [vmem:[%s197 + $0x10] sm:$0xff] %vm581, %v855
      %862 = vst [vmem:[%s197 + $0x18] sm:$0xff] %v856
      %863 = vst [vmem:[%s197 + $0x20] sm:$0xff] %v857
      %864 = vst.msk [vmem:[%s197 + $0x28] sm:$0xff] %vm581, %v858
      %p865 = scmp.lt.s32.totalorder %s15, 1
      %s866 = scalar_select %p865, %s15, 1
      %s867 = smul.addr %s866, 6
      %s868 = smul.addr %s867, 8
      %s869 = scalar_lea.vmem %s4, %s868
      // Predicated region
      $region37: #{mixconv_pallas.1} parent=35 // pred_check
        %p870 = pneg %p122
      $region38: #{mixconv_pallas.1} parent=35 // pred_check_branch
        %872 = sbr.rel (%p870) target = $region40
      $region39: #{mixconv_pallas.1} parent=35 // pred_region
        _
      $region40: #{mixconv_pallas.1} parent=35 // pred_fallthru
        _
    $region36: #{mixconv_pallas.1} parent=5 // pred_fallthru
      _
    %p873 = scmp.le.s32.totalorder 2, %s10
    // Predicated region
    $region41: #{mixconv_pallas.1} parent=5 // pred_check
      %p874 = pneg %p873
    $region42: #{mixconv_pallas.1} parent=5 // pred_check_branch
      %876 = sbr.rel (%p874) target = $region44
    $region43: #{mixconv_pallas.1} parent=5 // pred_region
      %s877 = ssub.s32 %s10, 2
      // Predicated region
      $region45: #{mixconv_pallas.1} parent=43 // pred_check
        %p878 = pneg %p128
      $region46: #{mixconv_pallas.1} parent=43 // pred_check_branch
        %880 = sbr.rel (%p878) target = $region48
      $region47: #{mixconv_pallas.1} parent=43 // pred_region
        %p881 = scmp.lt.s32.totalorder %s16, 1
        %s882 = scalar_select %p881, %s16, 1
        %s883 = smul.addr %s882, 6
        %s884 = smul.addr %s883, 8
        %s885 = scalar_lea.vmem %s4, %s884
      $region48: #{mixconv_pallas.1} parent=43 // pred_fallthru
        _
    $region44: #{mixconv_pallas.1} parent=5 // pred_fallthru
      _
  $region6: #{mixconv_pallas.1} parent=0 // loop_footer
    %s14 = sadd.s32 1, %s10
  $region7: #{mixconv_pallas.1} parent=0 // loop_footer_branch
    %9 = sbr.rel target = $region3
  $region8: #{mixconv_pallas.1} parent=0 // loop_exit
    _

</llo_original>
